<compile_context>
chip_gen: v7x
topology: tpu7x:2x2x1
jax: 0.10.0
libtpu: 0.0.40
codegen_flags: <defaults>
</compile_context>

<pallas_src>
import jax
import jax.numpy as jnp
from jax import lax
from jax.experimental import pallas as pl
from jax.experimental.pallas import tpu as pltpu

# problem sizes (small, consistent with the module: 4 Bayer input channels)
B = 2          # batch
H = 16         # height
W = 16         # width
CIN = 4        # Bayer RGGB channels
COUT = 4       # KronConv out_channels
MID = 32       # args.mid_channels
KS = 3         # conv kernel size
N_RGB = 3      # toRGB output channels

CIN_PAD = 8    # input channels zero-padded to a full sublane tile
OUT_PAD = 8    # output channels zero-padded to a full sublane tile
P = H * W      # flattened spatial per image: 256
BP = B * P     # batch folded onto lanes: 512 = 4 lane tiles

# static flattened offset per 3x3 tap, tap order t = dy*KS + dx
TAP_SHIFTS = tuple((dy - 1) * W + (dx - 1) for dy in range(KS) for dx in range(KS))


def bsr_kernel(x_ref, w1_ref, w2_ref, m_ref, out_ref, col_ref):
    """Single grid step, whole batch on the lane axis.

    x_ref  : (CIN_PAD, BP)          input, channels zero-padded 4 -> 8
    w1_ref : (MID, 9*CIN_PAD)       conv1 weights, im2col layout
    w2_ref : (9*OUT_PAD, MID)       conv2 weights (RGB mix folded), stacked per tap
    m_ref  : (9, OUT_PAD, BP)       precomputed per-tap boundary masks (f32)
    out_ref: (OUT_PAD, BP)          rows 0..2 = RGB, rows 3..7 = zeros
    col_ref: (9*CIN_PAD, BP)        VMEM scratch im2col slab for conv1
    """
    bp = x_ref.shape[-1]
    x = x_ref[...]

    # conv1 (3x3, 4->MID): gather the 9 taps on the 8-channel input side with
    # XLU lane rolls (wrap-around lanes are zeroed by the masks), write each
    # piece straight into the scratch slab, then one MXU dot + ReLU.
    for t, s in enumerate(TAP_SHIFTS):
        if s == 0:
            col_ref[pl.ds(CIN_PAD * t, CIN_PAD), :] = x          # center tap: no mask
        else:
            piece = pltpu.roll(x, (-s) % bp, axis=1)
            col_ref[pl.ds(CIN_PAD * t, CIN_PAD), :] = piece * m_ref[t]
    y1 = jnp.dot(w1_ref[...], col_ref[...], preferred_element_type=jnp.float32)
    y1 = jnp.maximum(y1, 0.0)                                     # (MID, BP)

    # conv2 (3x3, MID->RGB folded): output-stationary. One dot yields all 9
    # per-tap partial sums (72, BP); shift/mask the small 8-row partials
    # instead of im2col'ing the 288-row y1 slab.
    z = jnp.dot(w2_ref[...], y1, preferred_element_type=jnp.float32)  # (72, BP)
    acc = jnp.zeros((OUT_PAD, bp), jnp.float32)
    for t, s in enumerate(TAP_SHIFTS):
        zt = z[OUT_PAD * t:OUT_PAD * (t + 1), :]
        if s == 0:
            acc = acc + zt
        else:
            acc = acc + pltpu.roll(zt, (-s) % bp, axis=1) * m_ref[t]
    out_ref[...] = acc


def _tap_masks(batch):
    """(9, OUT_PAD, batch*P) f32 validity masks from per-image h/w boundaries."""
    q = jnp.arange(batch * P, dtype=jnp.int32) % P     # within-image position
    h = q // W
    w = q % W
    rows = []
    for dy in range(KS):
        for dx in range(KS):
            valid = jnp.ones((batch * P,), jnp.bool_)
            if dy == 0:
                valid = valid & (h >= 1)
            if dy == KS - 1:
                valid = valid & (h < H - 1)
            if dx == 0:
                valid = valid & (w >= 1)
            if dx == KS - 1:
                valid = valid & (w < W - 1)
            rows.append(valid)
    m = jnp.stack(rows, axis=0).astype(jnp.float32)               # (9, BP)
    # pre-broadcast to 8 sublanes so the kernel does a plain vmul (CIN_PAD == OUT_PAD)
    return jnp.broadcast_to(m[:, None, :], (KS * KS, OUT_PAD, batch * P))


def bsr_forward(x_nchw, w1, w2, rgb):
    """x_nchw: (B, 4, H, W) float32 -> (B, 3, H, W) float32."""
    b, cin, h, w = x_nchw.shape
    assert (cin, h, w) == (CIN, H, W)
    bp = b * P
    mid = w1.shape[-1]

    # input: batch folded onto the lane axis, channels zero-padded 4 -> 8
    x_flat = jnp.transpose(x_nchw, (1, 0, 2, 3)).reshape(cin, bp)
    x_pack = jnp.concatenate(
        [x_flat, jnp.zeros((CIN_PAD - cin, bp), x_flat.dtype)], axis=0)

    # conv1 weights (HWIO) -> (MID, 9*CIN_PAD), channels zero-padded to 8
    w1p = jnp.concatenate(
        [w1, jnp.zeros((KS, KS, CIN_PAD - cin, mid), w1.dtype)], axis=2)
    w1m = w1p.reshape(KS * KS * CIN_PAD, mid).T                   # (MID, 72)

    # conv2 weights with the (linear) Bayer->RGB mix folded in, stacked per tap
    # along rows: row block t holds that tap's (OUT_PAD, MID) matrix; output
    # rows zero-padded 3 -> 8 so the kernel stores full, unmasked vregs.
    w2f = jnp.einsum('hwmc,ck->hwmk', w2, rgb)                    # (3,3,MID,3)
    w2f = jnp.concatenate(
        [w2f, jnp.zeros((KS, KS, mid, OUT_PAD - N_RGB), w2f.dtype)], axis=3)
    w2s = jnp.transpose(w2f, (0, 1, 3, 2)).reshape(KS * KS * OUT_PAD, mid)

    masks = _tap_masks(b)                                         # (9, 8, BP)

    out = pl.pallas_call(
        bsr_kernel,
        out_shape=jax.ShapeDtypeStruct((OUT_PAD, bp), jnp.float32),
        grid_spec=pltpu.PrefetchScalarGridSpec(
            num_scalar_prefetch=0,
            grid=(1,),
            in_specs=[
                pl.BlockSpec((CIN_PAD, bp), lambda i: (0, 0)),
                pl.BlockSpec((MID, KS * KS * CIN_PAD), lambda i: (0, 0)),
                pl.BlockSpec((KS * KS * OUT_PAD, MID), lambda i: (0, 0)),
                pl.BlockSpec((KS * KS, OUT_PAD, bp), lambda i: (0, 0, 0)),
            ],
            out_specs=pl.BlockSpec((OUT_PAD, bp), lambda i: (0, 0)),
            scratch_shapes=[pltpu.VMEM((KS * KS * CIN_PAD, bp), jnp.float32)],
        ),
        compiler_params=pltpu.CompilerParams(
            dimension_semantics=("arbitrary",)),
    )(x_pack, w1m, w2s, masks)

    # drop the zero-padded output rows, un-fold batch from lanes, restore NCHW
    return jnp.transpose(out[:N_RGB].reshape(N_RGB, b, h, w), (1, 0, 2, 3))


def bsr_reference(x_nchw, w1, w2, rgb):
    """Pure-JAX reference (same math, XLA convs) for a correctness check."""
    dn = ("NCHW", "HWIO", "NCHW")
    y = lax.conv_general_dilated(x_nchw, w1, (1, 1), "SAME", dimension_numbers=dn)
    y = jnp.maximum(y, 0.0)
    y = lax.conv_general_dilated(y, w2, (1, 1), "SAME", dimension_numbers=dn)
    return jnp.einsum('bchw,ck->bkhw', y, rgb)


if __name__ == "__main__":
    key = jax.random.PRNGKey(0)
    kx, kw1, kw2 = jax.random.split(key, 3)

    # deterministic synthetic parameters (no checkpoint load)
    x = jax.random.normal(kx, (B, CIN, H, W), jnp.float32)
    w1 = jax.random.normal(kw1, (KS, KS, CIN, MID), jnp.float32) * 0.1   # conv1 HWIO
    w2 = jax.random.normal(kw2, (KS, KS, MID, COUT), jnp.float32) * 0.1  # conv2 HWIO
    # ApplyBayer2RGB (normalize=False): R = c0, G = (c1+c2)/2, B = c3
    rgb_mix = jnp.array([[1.0, 0.0, 0.0],
                         [0.0, 0.5, 0.0],
                         [0.0, 0.5, 0.0],
                         [0.0, 0.0, 1.0]], jnp.float32)

    out = jax.block_until_ready(bsr_forward(x, w1, w2, rgb_mix))
    ref = bsr_reference(x, w1, w2, rgb_mix)

    assert out.shape == (B, N_RGB, H, W), out.shape
    assert jnp.allclose(out, ref, atol=2e-3, rtol=2e-3), "mismatch vs reference"

    print("KERNEL_OK")
</pallas_src>

<mosaic_0001>
module attributes {stable_mosaic.version = 11 : i64} {
  func.func @bsr_kernel(%arg0: i32, %arg1: memref<8x512xf32, #tpu.memory_space<vmem>>, %arg2: memref<32x72xf32, #tpu.memory_space<vmem>>, %arg3: memref<72x32xf32, #tpu.memory_space<vmem>>, %arg4: memref<9x8x512xf32, #tpu.memory_space<vmem>>, %arg5: memref<8x512xf32, #tpu.memory_space<vmem>>, %arg6: memref<72x512xf32, #tpu.memory_space<vmem>>) attributes {dimension_semantics = [#tpu.dimension_semantics<arbitrary>], iteration_bounds = array<i64: 1>, scalar_prefetch = 0 : i64, scratch_operands = 1 : i64, tpu.core_type = #tpu.core_type<tc>, window_params = [{pipeline_mode = #tpu.pipeline_mode<synchronous>, transform_indices = @transform_0, window_bounds = array<i64: 8, 512>}, {pipeline_mode = #tpu.pipeline_mode<synchronous>, transform_indices = @transform_1, window_bounds = array<i64: 32, 72>}, {pipeline_mode = #tpu.pipeline_mode<synchronous>, transform_indices = @transform_2, window_bounds = array<i64: 72, 32>}, {pipeline_mode = #tpu.pipeline_mode<synchronous>, transform_indices = @transform_3, window_bounds = array<i64: 9, 8, 512>}, {pipeline_mode = #tpu.pipeline_mode<synchronous>, transform_indices = @transform_4, window_bounds = array<i64: 8, 512>}]} {
    %c0 = arith.constant 0 : index
    %c0_0 = arith.constant 0 : index
    %0 = vector.load %arg1[%c0, %c0_0] : memref<8x512xf32, #tpu.memory_space<vmem>>, vector<8x512xf32>
    %c17_i32 = arith.constant 17 : i32
    %1 = tpu.dynamic_rotate %0 by %c17_i32 dim 1 : vector<8x512xf32>, i32 -> vector<8x512xf32>
    %c0_1 = arith.constant 0 : index
    %c0_2 = arith.constant 0 : index
    %c0_3 = arith.constant 0 : index
    %2 = vector.load %arg4[%c0_1, %c0_2, %c0_3] : memref<9x8x512xf32, #tpu.memory_space<vmem>>, vector<1x8x512xf32>
    %3 = vector.shape_cast %2 : vector<1x8x512xf32> to vector<8x512xf32>
    %4 = arith.mulf %1, %3 : vector<8x512xf32>
    %c0_4 = arith.constant 0 : index
    %c0_5 = arith.constant 0 : index
    %5 = vector.load %arg6[%c0_4, %c0_5] : memref<72x512xf32, #tpu.memory_space<vmem>>, vector<8x512xf32>
    tpu.vector_store %arg6[%c0_4, %c0_5], %4 {strides = array<i32>} : memref<72x512xf32, #tpu.memory_space<vmem>>, vector<8x512xf32>,
    %c16_i32 = arith.constant 16 : i32
    %6 = tpu.dynamic_rotate %0 by %c16_i32 dim 1 : vector<8x512xf32>, i32 -> vector<8x512xf32>
    %c1 = arith.constant 1 : index
    %c0_6 = arith.constant 0 : index
    %c0_7 = arith.constant 0 : index
    %7 = vector.load %arg4[%c1, %c0_6, %c0_7] : memref<9x8x512xf32, #tpu.memory_space<vmem>>, vector<1x8x512xf32>
    %8 = vector.shape_cast %7 : vector<1x8x512xf32> to vector<8x512xf32>
    %9 = arith.mulf %6, %8 : vector<8x512xf32>
    %c8 = arith.constant 8 : index
    %c0_8 = arith.constant 0 : index
    %10 = vector.load %arg6[%c8, %c0_8] : memref<72x512xf32, #tpu.memory_space<vmem>>, vector<8x512xf32>
    tpu.vector_store %arg6[%c8, %c0_8], %9 {strides = array<i32>} : memref<72x512xf32, #tpu.memory_space<vmem>>, vector<8x512xf32>,
    %c15_i32 = arith.constant 15 : i32
    %11 = tpu.dynamic_rotate %0 by %c15_i32 dim 1 : vector<8x512xf32>, i32 -> vector<8x512xf32>
    %c2 = arith.constant 2 : index
    %c0_9 = arith.constant 0 : index
    %c0_10 = arith.constant 0 : index
    %12 = vector.load %arg4[%c2, %c0_9, %c0_10] : memref<9x8x512xf32, #tpu.memory_space<vmem>>, vector<1x8x512xf32>
    %13 = vector.shape_cast %12 : vector<1x8x512xf32> to vector<8x512xf32>
    %14 = arith.mulf %11, %13 : vector<8x512xf32>
    %c16 = arith.constant 16 : index
    %c0_11 = arith.constant 0 : index
    %15 = vector.load %arg6[%c16, %c0_11] : memref<72x512xf32, #tpu.memory_space<vmem>>, vector<8x512xf32>
    tpu.vector_store %arg6[%c16, %c0_11], %14 {strides = array<i32>} : memref<72x512xf32, #tpu.memory_space<vmem>>, vector<8x512xf32>,
    %c1_i32 = arith.constant 1 : i32
    %16 = tpu.dynamic_rotate %0 by %c1_i32 dim 1 : vector<8x512xf32>, i32 -> vector<8x512xf32>
    %c3 = arith.constant 3 : index
    %c0_12 = arith.constant 0 : index
    %c0_13 = arith.constant 0 : index
    %17 = vector.load %arg4[%c3, %c0_12, %c0_13] : memref<9x8x512xf32, #tpu.memory_space<vmem>>, vector<1x8x512xf32>
    %18 = vector.shape_cast %17 : vector<1x8x512xf32> to vector<8x512xf32>
    %19 = arith.mulf %16, %18 : vector<8x512xf32>
    %c24 = arith.constant 24 : index
    %c0_14 = arith.constant 0 : index
    %20 = vector.load %arg6[%c24, %c0_14] : memref<72x512xf32, #tpu.memory_space<vmem>>, vector<8x512xf32>
    tpu.vector_store %arg6[%c24, %c0_14], %19 {strides = array<i32>} : memref<72x512xf32, #tpu.memory_space<vmem>>, vector<8x512xf32>,
    %c32 = arith.constant 32 : index
    %c0_15 = arith.constant 0 : index
    %21 = vector.load %arg6[%c32, %c0_15] : memref<72x512xf32, #tpu.memory_space<vmem>>, vector<8x512xf32>
    tpu.vector_store %arg6[%c32, %c0_15], %0 {strides = array<i32>} : memref<72x512xf32, #tpu.memory_space<vmem>>, vector<8x512xf32>,
    %c511_i32 = arith.constant 511 : i32
    %22 = tpu.dynamic_rotate %0 by %c511_i32 dim 1 : vector<8x512xf32>, i32 -> vector<8x512xf32>
    %c5 = arith.constant 5 : index
    %c0_16 = arith.constant 0 : index
    %c0_17 = arith.constant 0 : index
    %23 = vector.load %arg4[%c5, %c0_16, %c0_17] : memref<9x8x512xf32, #tpu.memory_space<vmem>>, vector<1x8x512xf32>
    %24 = vector.shape_cast %23 : vector<1x8x512xf32> to vector<8x512xf32>
    %25 = arith.mulf %22, %24 : vector<8x512xf32>
    %c40 = arith.constant 40 : index
    %c0_18 = arith.constant 0 : index
    %26 = vector.load %arg6[%c40, %c0_18] : memref<72x512xf32, #tpu.memory_space<vmem>>, vector<8x512xf32>
    tpu.vector_store %arg6[%c40, %c0_18], %25 {strides = array<i32>} : memref<72x512xf32, #tpu.memory_space<vmem>>, vector<8x512xf32>,
    %c497_i32 = arith.constant 497 : i32
    %27 = tpu.dynamic_rotate %0 by %c497_i32 dim 1 : vector<8x512xf32>, i32 -> vector<8x512xf32>
    %c6 = arith.constant 6 : index
    %c0_19 = arith.constant 0 : index
    %c0_20 = arith.constant 0 : index
    %28 = vector.load %arg4[%c6, %c0_19, %c0_20] : memref<9x8x512xf32, #tpu.memory_space<vmem>>, vector<1x8x512xf32>
    %29 = vector.shape_cast %28 : vector<1x8x512xf32> to vector<8x512xf32>
    %30 = arith.mulf %27, %29 : vector<8x512xf32>
    %c48 = arith.constant 48 : index
    %c0_21 = arith.constant 0 : index
    %31 = vector.load %arg6[%c48, %c0_21] : memref<72x512xf32, #tpu.memory_space<vmem>>, vector<8x512xf32>
    tpu.vector_store %arg6[%c48, %c0_21], %30 {strides = array<i32>} : memref<72x512xf32, #tpu.memory_space<vmem>>, vector<8x512xf32>,
    %c496_i32 = arith.constant 496 : i32
    %32 = tpu.dynamic_rotate %0 by %c496_i32 dim 1 : vector<8x512xf32>, i32 -> vector<8x512xf32>
    %c7 = arith.constant 7 : index
    %c0_22 = arith.constant 0 : index
    %c0_23 = arith.constant 0 : index
    %33 = vector.load %arg4[%c7, %c0_22, %c0_23] : memref<9x8x512xf32, #tpu.memory_space<vmem>>, vector<1x8x512xf32>
    %34 = vector.shape_cast %33 : vector<1x8x512xf32> to vector<8x512xf32>
    %35 = arith.mulf %32, %34 : vector<8x512xf32>
    %c56 = arith.constant 56 : index
    %c0_24 = arith.constant 0 : index
    %36 = vector.load %arg6[%c56, %c0_24] : memref<72x512xf32, #tpu.memory_space<vmem>>, vector<8x512xf32>
    tpu.vector_store %arg6[%c56, %c0_24], %35 {strides = array<i32>} : memref<72x512xf32, #tpu.memory_space<vmem>>, vector<8x512xf32>,
    %c495_i32 = arith.constant 495 : i32
    %37 = tpu.dynamic_rotate %0 by %c495_i32 dim 1 : vector<8x512xf32>, i32 -> vector<8x512xf32>
    %c8_25 = arith.constant 8 : index
    %c0_26 = arith.constant 0 : index
    %c0_27 = arith.constant 0 : index
    %38 = vector.load %arg4[%c8_25, %c0_26, %c0_27] : memref<9x8x512xf32, #tpu.memory_space<vmem>>, vector<1x8x512xf32>
    %39 = vector.shape_cast %38 : vector<1x8x512xf32> to vector<8x512xf32>
    %40 = arith.mulf %37, %39 : vector<8x512xf32>
    %c64 = arith.constant 64 : index
    %c0_28 = arith.constant 0 : index
    %41 = vector.load %arg6[%c64, %c0_28] : memref<72x512xf32, #tpu.memory_space<vmem>>, vector<8x512xf32>
    tpu.vector_store %arg6[%c64, %c0_28], %40 {strides = array<i32>} : memref<72x512xf32, #tpu.memory_space<vmem>>, vector<8x512xf32>,
    %c0_29 = arith.constant 0 : index
    %c0_30 = arith.constant 0 : index
    %42 = vector.load %arg2[%c0_29, %c0_30] : memref<32x72xf32, #tpu.memory_space<vmem>>, vector<32x72xf32>
    %c0_31 = arith.constant 0 : index
    %c0_32 = arith.constant 0 : index
    %43 = vector.load %arg6[%c0_31, %c0_32] : memref<72x512xf32, #tpu.memory_space<vmem>>, vector<72x512xf32>
    %cst = arith.constant dense<0.000000e+00> : vector<32x512xf32>
    %44 = tpu.matmul %42, %43, %cst {dimension_numbers = #tpu.dot_dimension_numbers<[1], [0], [0], [1], [0, 0, 1, 1], [], []>} : vector<32x72xf32>, vector<72x512xf32>, vector<32x512xf32> -> vector<32x512xf32>
    %cst_33 = arith.constant 0.000000e+00 : f32
    %45 = vector.broadcast %cst_33 : f32 to vector<32x512xf32>
    %46 = arith.maximumf %44, %45 : vector<32x512xf32>
    %c0_34 = arith.constant 0 : index
    %c0_35 = arith.constant 0 : index
    %47 = vector.load %arg3[%c0_34, %c0_35] : memref<72x32xf32, #tpu.memory_space<vmem>>, vector<72x32xf32>
    %cst_36 = arith.constant dense<0.000000e+00> : vector<72x512xf32>
    %48 = tpu.matmul %47, %46, %cst_36 {dimension_numbers = #tpu.dot_dimension_numbers<[1], [0], [0], [1], [0, 0, 1, 1], [], []>} : vector<72x32xf32>, vector<32x512xf32>, vector<72x512xf32> -> vector<72x512xf32>
    %cst_37 = arith.constant 0.000000e+00 : f32
    %49 = vector.broadcast %cst_37 : f32 to vector<8x512xf32>
    %50 = vector.extract_strided_slice %48 {offsets = [0, 0], sizes = [8, 512], strides = [1, 1]} : vector<72x512xf32> to vector<8x512xf32>
    %c17_i32_38 = arith.constant 17 : i32
    %51 = tpu.dynamic_rotate %50 by %c17_i32_38 dim 1 : vector<8x512xf32>, i32 -> vector<8x512xf32>
    %c0_39 = arith.constant 0 : index
    %c0_40 = arith.constant 0 : index
    %c0_41 = arith.constant 0 : index
    %52 = vector.load %arg4[%c0_39, %c0_40, %c0_41] : memref<9x8x512xf32, #tpu.memory_space<vmem>>, vector<1x8x512xf32>
    %53 = vector.shape_cast %52 : vector<1x8x512xf32> to vector<8x512xf32>
    %54 = arith.mulf %51, %53 : vector<8x512xf32>
    %55 = arith.addf %49, %54 : vector<8x512xf32>
    %56 = vector.extract_strided_slice %48 {offsets = [8, 0], sizes = [8, 512], strides = [1, 1]} : vector<72x512xf32> to vector<8x512xf32>
    %c16_i32_42 = arith.constant 16 : i32
    %57 = tpu.dynamic_rotate %56 by %c16_i32_42 dim 1 : vector<8x512xf32>, i32 -> vector<8x512xf32>
    %c1_43 = arith.constant 1 : index
    %c0_44 = arith.constant 0 : index
    %c0_45 = arith.constant 0 : index
    %58 = vector.load %arg4[%c1_43, %c0_44, %c0_45] : memref<9x8x512xf32, #tpu.memory_space<vmem>>, vector<1x8x512xf32>
    %59 = vector.shape_cast %58 : vector<1x8x512xf32> to vector<8x512xf32>
    %60 = arith.mulf %57, %59 : vector<8x512xf32>
    %61 = arith.addf %55, %60 : vector<8x512xf32>
    %62 = vector.extract_strided_slice %48 {offsets = [16, 0], sizes = [8, 512], strides = [1, 1]} : vector<72x512xf32> to vector<8x512xf32>
    %c15_i32_46 = arith.constant 15 : i32
    %63 = tpu.dynamic_rotate %62 by %c15_i32_46 dim 1 : vector<8x512xf32>, i32 -> vector<8x512xf32>
    %c2_47 = arith.constant 2 : index
    %c0_48 = arith.constant 0 : index
    %c0_49 = arith.constant 0 : index
    %64 = vector.load %arg4[%c2_47, %c0_48, %c0_49] : memref<9x8x512xf32, #tpu.memory_space<vmem>>, vector<1x8x512xf32>
    %65 = vector.shape_cast %64 : vector<1x8x512xf32> to vector<8x512xf32>
    %66 = arith.mulf %63, %65 : vector<8x512xf32>
    %67 = arith.addf %61, %66 : vector<8x512xf32>
    %68 = vector.extract_strided_slice %48 {offsets = [24, 0], sizes = [8, 512], strides = [1, 1]} : vector<72x512xf32> to vector<8x512xf32>
    %c1_i32_50 = arith.constant 1 : i32
    %69 = tpu.dynamic_rotate %68 by %c1_i32_50 dim 1 : vector<8x512xf32>, i32 -> vector<8x512xf32>
    %c3_51 = arith.constant 3 : index
    %c0_52 = arith.constant 0 : index
    %c0_53 = arith.constant 0 : index
    %70 = vector.load %arg4[%c3_51, %c0_52, %c0_53] : memref<9x8x512xf32, #tpu.memory_space<vmem>>, vector<1x8x512xf32>
    %71 = vector.shape_cast %70 : vector<1x8x512xf32> to vector<8x512xf32>
    %72 = arith.mulf %69, %71 : vector<8x512xf32>
    %73 = arith.addf %67, %72 : vector<8x512xf32>
    %74 = vector.extract_strided_slice %48 {offsets = [32, 0], sizes = [8, 512], strides = [1, 1]} : vector<72x512xf32> to vector<8x512xf32>
    %75 = arith.addf %73, %74 : vector<8x512xf32>
    %76 = vector.extract_strided_slice %48 {offsets = [40, 0], sizes = [8, 512], strides = [1, 1]} : vector<72x512xf32> to vector<8x512xf32>
    %c511_i32_54 = arith.constant 511 : i32
    %77 = tpu.dynamic_rotate %76 by %c511_i32_54 dim 1 : vector<8x512xf32>, i32 -> vector<8x512xf32>
    %c5_55 = arith.constant 5 : index
    %c0_56 = arith.constant 0 : index
    %c0_57 = arith.constant 0 : index
    %78 = vector.load %arg4[%c5_55, %c0_56, %c0_57] : memref<9x8x512xf32, #tpu.memory_space<vmem>>, vector<1x8x512xf32>
    %79 = vector.shape_cast %78 : vector<1x8x512xf32> to vector<8x512xf32>
    %80 = arith.mulf %77, %79 : vector<8x512xf32>
    %81 = arith.addf %75, %80 : vector<8x512xf32>
    %82 = vector.extract_strided_slice %48 {offsets = [48, 0], sizes = [8, 512], strides = [1, 1]} : vector<72x512xf32> to vector<8x512xf32>
    %c497_i32_58 = arith.constant 497 : i32
    %83 = tpu.dynamic_rotate %82 by %c497_i32_58 dim 1 : vector<8x512xf32>, i32 -> vector<8x512xf32>
    %c6_59 = arith.constant 6 : index
    %c0_60 = arith.constant 0 : index
    %c0_61 = arith.constant 0 : index
    %84 = vector.load %arg4[%c6_59, %c0_60, %c0_61] : memref<9x8x512xf32, #tpu.memory_space<vmem>>, vector<1x8x512xf32>
    %85 = vector.shape_cast %84 : vector<1x8x512xf32> to vector<8x512xf32>
    %86 = arith.mulf %83, %85 : vector<8x512xf32>
    %87 = arith.addf %81, %86 : vector<8x512xf32>
    %88 = vector.extract_strided_slice %48 {offsets = [56, 0], sizes = [8, 512], strides = [1, 1]} : vector<72x512xf32> to vector<8x512xf32>
    %c496_i32_62 = arith.constant 496 : i32
    %89 = tpu.dynamic_rotate %88 by %c496_i32_62 dim 1 : vector<8x512xf32>, i32 -> vector<8x512xf32>
    %c7_63 = arith.constant 7 : index
    %c0_64 = arith.constant 0 : index
    %c0_65 = arith.constant 0 : index
    %90 = vector.load %arg4[%c7_63, %c0_64, %c0_65] : memref<9x8x512xf32, #tpu.memory_space<vmem>>, vector<1x8x512xf32>
    %91 = vector.shape_cast %90 : vector<1x8x512xf32> to vector<8x512xf32>
    %92 = arith.mulf %89, %91 : vector<8x512xf32>
    %93 = arith.addf %87, %92 : vector<8x512xf32>
    %94 = vector.extract_strided_slice %48 {offsets = [64, 0], sizes = [8, 512], strides = [1, 1]} : vector<72x512xf32> to vector<8x512xf32>
    %c495_i32_66 = arith.constant 495 : i32
    %95 = tpu.dynamic_rotate %94 by %c495_i32_66 dim 1 : vector<8x512xf32>, i32 -> vector<8x512xf32>
    %c8_67 = arith.constant 8 : index
    %c0_68 = arith.constant 0 : index
    %c0_69 = arith.constant 0 : index
    %96 = vector.load %arg4[%c8_67, %c0_68, %c0_69] : memref<9x8x512xf32, #tpu.memory_space<vmem>>, vector<1x8x512xf32>
    %97 = vector.shape_cast %96 : vector<1x8x512xf32> to vector<8x512xf32>
    %98 = arith.mulf %95, %97 : vector<8x512xf32>
    %99 = arith.addf %93, %98 : vector<8x512xf32>
    %c0_70 = arith.constant 0 : index
    %c0_71 = arith.constant 0 : index
    %100 = vector.load %arg5[%c0_70, %c0_71] : memref<8x512xf32, #tpu.memory_space<vmem>>, vector<8x512xf32>
    tpu.vector_store %arg5[%c0_70, %c0_71], %99 {strides = array<i32>} : memref<8x512xf32, #tpu.memory_space<vmem>>, vector<8x512xf32>,
    return
  }
  func.func @transform_0(%arg0: i32) -> (i32, i32) {
    %c0_i32 = arith.constant 0 : i32
    %c0_i32_0 = arith.constant 0 : i32
    %c0_i32_1 = arith.constant 0 : i32
    return %c0_i32, %c0_i32_0 : i32, i32
  }
  func.func @transform_1(%arg0: i32) -> (i32, i32) {
    %c0_i32 = arith.constant 0 : i32
    %c0_i32_0 = arith.constant 0 : i32
    %c0_i32_1 = arith.constant 0 : i32
    return %c0_i32, %c0_i32_0 : i32, i32
  }
  func.func @transform_2(%arg0: i32) -> (i32, i32) {
    %c0_i32 = arith.constant 0 : i32
    %c0_i32_0 = arith.constant 0 : i32
    %c0_i32_1 = arith.constant 0 : i32
    return %c0_i32, %c0_i32_0 : i32, i32
  }
  func.func @transform_3(%arg0: i32) -> (i32, i32, i32) {
    %c0_i32 = arith.constant 0 : i32
    %c0_i32_0 = arith.constant 0 : i32
    %c0_i32_1 = arith.constant 0 : i32
    %c0_i32_2 = arith.constant 0 : i32
    return %c0_i32, %c0_i32_0, %c0_i32_1 : i32, i32, i32
  }
  func.func @transform_4(%arg0: i32) -> (i32, i32) {
    %c0_i32 = arith.constant 0 : i32
    %c0_i32_0 = arith.constant 0 : i32
    %c0_i32_1 = arith.constant 0 : i32
    return %c0_i32, %c0_i32_0 : i32, i32
  }
}

</mosaic_0001>

<llo_original>
// kernel: tpu_custom_call.1
$region0: #{tpu_custom_call.1}
  #allocation0 [shape = 'u32[]', space=smem, size = 0x4, offset = 0x4, fixed_abs, tag = 'smem constant byte address 0x4 - core index']
  #allocation1 [shape = 'u32[144,128]{1,0:T(1,128)}', space=vmem, size = 0x12000, scoped, tag = 'internal scratch']
  #allocation2 [shape = 'f32[72,512]{1,0:T(8,128)}', space=vmem, size = 0x24000, scoped, tag = 'scratch operand']
  %s0 = inlined_call_operand.vmem [shape: f32[8,512], index: 0, kind: input, shape index: {}]
  %s1 = inlined_call_operand.vmem [shape: f32[32,72], index: 1, kind: input, shape index: {}]
  %s2 = inlined_call_operand.vmem [shape: f32[72,32], index: 2, kind: input, shape index: {}]
  %s3 = inlined_call_operand.hbm [shape: f32[9,8,512], index: 3, kind: input, shape index: {}]
  %s4 = inlined_call_operand.hbm [shape: f32[8,512], index: 4, kind: output, shape index: {}]
  %s5 = sld [smem:[#allocation0]]
  $region30: #{tpu_custom_call.1} parent=0
    _
  %s7 = ssub.s32 1, %s5
  %s8 = scalar_select 0, %s7, %s5
  $region1: #{tpu_custom_call.1} parent=0
    #allocation3 [shape = 'u8[147456]{0}', space=vmem, size = 0x24000, scoped, tag = 'input window, operand 3, single buffered']
    #allocation4 [shape = 's32[1]{0}', space=sflag, size = 0x4, scoped, tag = 'scoped memory for tpu_custom_call.1']
    #allocation5 [shape = 's32[1]{0}', space=sflag, size = 0x4, scoped, tag = 'scoped memory for tpu_custom_call.1']
    #allocation6 [shape = 'u8[16384]{0}', space=vmem, size = 0x4000, scoped, tag = 'output window, operand 0, single buffered']
    %9 = vsyncpa [#allocation4], 0
    %10 = vsyncpa [#allocation5], 0
    // Predicated region
    $region2: #{tpu_custom_call.1} parent=1 // pred_check
      _
    $region3: #{tpu_custom_call.1} parent=1 // pred_check_branch
      %12 = sbr.rel (0) target = $region5
    $region4: #{tpu_custom_call.1} parent=1 // pred_region
      _
    $region5: #{tpu_custom_call.1} parent=1 // pred_fallthru
      _
    // Predicated region
    $region6: #{tpu_custom_call.1} parent=1 // pred_check
      _
    $region7: #{tpu_custom_call.1} parent=1 // pred_check_branch
      %14 = sbr.rel (0) target = $region9
    $region8: #{tpu_custom_call.1} parent=1 // pred_region
      _
    $region9: #{tpu_custom_call.1} parent=1 // pred_fallthru
      _
    // Predicated region
    $region10: #{tpu_custom_call.1} parent=1 // pred_check
      _
    $region11: #{tpu_custom_call.1} parent=1 // pred_check_branch
      %16 = sbr.rel (0) target = $region13
    $region12: #{tpu_custom_call.1} parent=1 // pred_region
      _
    $region13: #{tpu_custom_call.1} parent=1 // pred_fallthru
      _
    // Predicated region
    $region14: #{tpu_custom_call.1} parent=1 // pred_check
      _
    $region15: #{tpu_custom_call.1} parent=1 // pred_check_branch
      %18 = sbr.rel (0) target = $region17
    $region16: #{tpu_custom_call.1} parent=1 // pred_region
      %s20 = ssub.s32 4608, 4608
      %21 = vsyncadd [#allocation4], %s20
      %s22 = sshll.u32 [#allocation3], 4
      %s23 = int_to_ptr.vmem [resolvable:$true] %s22
      %28 = dma.hbm_to_vmem [thread:$0]  %s3, 4608, %s23, [#allocation4], 512, 512, 32
    $region17: #{tpu_custom_call.1} parent=1 // pred_fallthru
      _
    // Predicated region
    $region18: #{tpu_custom_call.1} parent=1 // pred_check
      _
    $region19: #{tpu_custom_call.1} parent=1 // pred_check_branch
      %30 = sbr.rel (0) target = $region21
    $region20: #{tpu_custom_call.1} parent=1 // pred_region
      %31 = dma.done [#allocation4], 4608
    $region21: #{tpu_custom_call.1} parent=1 // pred_fallthru
      _
    %v32 = vld [vmem:[%s0] sm:$0xff]
    %v33 = vld [vmem:[%s0 + $0x8] sm:$0xff]
    %v34 = vld [vmem:[%s0 + $0x10] sm:$0xff]
    %v35 = vld [vmem:[%s0 + $0x18] sm:$0xff]
    %36 = vrot.lane.b32.xlu0 %v32, 17
    %v37 = vpop.permute.xlu0 %36
    %38 = vrot.lane.b32.xlu0 %v33, 17
    %v39 = vpop.permute.xlu0 %38
    %40 = vrot.lane.b32.xlu0 %v34, 17
    %v41 = vpop.permute.xlu0 %40
    %42 = vrot.lane.b32.xlu0 %v35, 17
    %v43 = vpop.permute.xlu0 %42
    %v44 = vlaneseq
    %v45 = vand.u32 %v44, 127
    %vm46 = vcmp.lt.s32.totalorder %v45, 17
    %v47 = vsel %vm46, %v41, %v43
    %v48 = vsel %vm46, %v39, %v41
    %v49 = vsel %vm46, %v37, %v39
    %v50 = vsel %vm46, %v43, %v37
    %v51 = vld [vmem:[#allocation3] sm:$0xff]
    %v52 = vld [vmem:[#allocation3 + $0x8] sm:$0xff]
    %v53 = vld [vmem:[#allocation3 + $0x10] sm:$0xff]
    %v54 = vld [vmem:[#allocation3 + $0x18] sm:$0xff]
    %v55 = vmul.f32 %v50, %v51
    %v56 = vmul.f32 %v49, %v52
    %v57 = vmul.f32 %v48, %v53
    %v58 = vmul.f32 %v47, %v54
    %59 = vst [vmem:[#allocation2] sm:$0xff] %v55
    %60 = vst [vmem:[#allocation2 + $0x8] sm:$0xff] %v56
    %61 = vst [vmem:[#allocation2 + $0x10] sm:$0xff] %v57
    %62 = vst [vmem:[#allocation2 + $0x18] sm:$0xff] %v58
    %63 = vrot.lane.b32.xlu0 %v32, 16
    %v64 = vpop.permute.xlu0 %63
    %65 = vrot.lane.b32.xlu0 %v33, 16
    %v66 = vpop.permute.xlu0 %65
    %67 = vrot.lane.b32.xlu0 %v34, 16
    %v68 = vpop.permute.xlu0 %67
    %69 = vrot.lane.b32.xlu0 %v35, 16
    %v70 = vpop.permute.xlu0 %69
    %vm71 = vcmp.lt.s32.totalorder %v45, 16
    %v72 = vsel %vm71, %v68, %v70
    %v73 = vsel %vm71, %v66, %v68
    %v74 = vsel %vm71, %v64, %v66
    %v75 = vsel %vm71, %v70, %v64
    %s76 = scalar_lea.vmem [#allocation3], 32
    %v77 = vld [vmem:[%s76] sm:$0xff]
    %v78 = vld [vmem:[%s76 + $0x8] sm:$0xff]
    %v79 = vld [vmem:[%s76 + $0x10] sm:$0xff]
    %v80 = vld [vmem:[%s76 + $0x18] sm:$0xff]
    %v81 = vmul.f32 %v75, %v77
    %v82 = vmul.f32 %v74, %v78
    %v83 = vmul.f32 %v73, %v79
    %v84 = vmul.f32 %v72, %v80
    %85 = vst [vmem:[#allocation2 + $0x20] sm:$0xff] %v81
    %86 = vst [vmem:[#allocation2 + $0x28] sm:$0xff] %v82
    %87 = vst [vmem:[#allocation2 + $0x30] sm:$0xff] %v83
    %88 = vst [vmem:[#allocation2 + $0x38] sm:$0xff] %v84
    %89 = vrot.lane.b32.xlu0 %v32, 15
    %v90 = vpop.permute.xlu0 %89
    %91 = vrot.lane.b32.xlu0 %v33, 15
    %v92 = vpop.permute.xlu0 %91
    %93 = vrot.lane.b32.xlu0 %v34, 15
    %v94 = vpop.permute.xlu0 %93
    %95 = vrot.lane.b32.xlu0 %v35, 15
    %v96 = vpop.permute.xlu0 %95
    %vm97 = vcmp.lt.s32.totalorder %v45, 15
    %v98 = vsel %vm97, %v94, %v96
    %v99 = vsel %vm97, %v92, %v94
    %v100 = vsel %vm97, %v90, %v92
    %v101 = vsel %vm97, %v96, %v90
    %s102 = scalar_lea.vmem [#allocation3], 64
    %v103 = vld [vmem:[%s102] sm:$0xff]
    %v104 = vld [vmem:[%s102 + $0x8] sm:$0xff]
    %v105 = vld [vmem:[%s102 + $0x10] sm:$0xff]
    %v106 = vld [vmem:[%s102 + $0x18] sm:$0xff]
    %v107 = vmul.f32 %v101, %v103
    %v108 = vmul.f32 %v100, %v104
    %v109 = vmul.f32 %v99, %v105
    %v110 = vmul.f32 %v98, %v106
    %111 = vst [vmem:[#allocation2 + $0x40] sm:$0xff] %v107
    %112 = vst [vmem:[#allocation2 + $0x48] sm:$0xff] %v108
    %113 = vst [vmem:[#allocation2 + $0x50] sm:$0xff] %v109
    %114 = vst [vmem:[#allocation2 + $0x58] sm:$0xff] %v110
    %115 = vrot.lane.b32.xlu0 %v32, 1
    %v116 = vpop.permute.xlu0 %115
    %117 = vrot.lane.b32.xlu0 %v33, 1
    %v118 = vpop.permute.xlu0 %117
    %119 = vrot.lane.b32.xlu0 %v34, 1
    %v120 = vpop.permute.xlu0 %119
    %121 = vrot.lane.b32.xlu0 %v35, 1
    %v122 = vpop.permute.xlu0 %121
    %vm123 = vcmp.lt.s32.totalorder %v45, 1
    %v124 = vsel %vm123, %v120, %v122
    %v125 = vsel %vm123, %v118, %v120
    %v126 = vsel %vm123, %v116, %v118
    %v127 = vsel %vm123, %v122, %v116
    %s128 = scalar_lea.vmem [#allocation3], 96
    %v129 = vld [vmem:[%s128] sm:$0xff]
    %v130 = vld [vmem:[%s128 + $0x8] sm:$0xff]
    %v131 = vld [vmem:[%s128 + $0x10] sm:$0xff]
    %v132 = vld [vmem:[%s128 + $0x18] sm:$0xff]
    %v133 = vmul.f32 %v127, %v129
    %v134 = vmul.f32 %v126, %v130
    %v135 = vmul.f32 %v125, %v131
    %v136 = vmul.f32 %v124, %v132
    %137 = vst [vmem:[#allocation2 + $0x60] sm:$0xff] %v133
    %138 = vst [vmem:[#allocation2 + $0x68] sm:$0xff] %v134
    %139 = vst [vmem:[#allocation2 + $0x70] sm:$0xff] %v135
    %140 = vst [vmem:[#allocation2 + $0x78] sm:$0xff] %v136
    %141 = vst [vmem:[#allocation2 + $0x80] sm:$0xff] %v32
    %142 = vst [vmem:[#allocation2 + $0x88] sm:$0xff] %v33
    %143 = vst [vmem:[#allocation2 + $0x90] sm:$0xff] %v34
    %144 = vst [vmem:[#allocation2 + $0x98] sm:$0xff] %v35
    %145 = vrot.lane.b32.xlu0 %v32, 127
    %v146 = vpop.permute.xlu0 %145
    %147 = vrot.lane.b32.xlu0 %v33, 127
    %v148 = vpop.permute.xlu0 %147
    %149 = vrot.lane.b32.xlu0 %v34, 127
    %v150 = vpop.permute.xlu0 %149
    %151 = vrot.lane.b32.xlu0 %v35, 127
    %v152 = vpop.permute.xlu0 %151
    %vm153 = vcmp.lt.s32.totalorder %v45, 127
    %v154 = vsel %vm153, %v150, %v152
    %v155 = vsel %vm153, %v148, %v150
    %v156 = vsel %vm153, %v146, %v148
    %v157 = vsel %vm153, %v152, %v146
    %s158 = scalar_lea.vmem [#allocation3], 160
    %v159 = vld [vmem:[%s158] sm:$0xff]
    %v160 = vld [vmem:[%s158 + $0x8] sm:$0xff]
    %v161 = vld [vmem:[%s158 + $0x10] sm:$0xff]
    %v162 = vld [vmem:[%s158 + $0x18] sm:$0xff]
    %v163 = vmul.f32 %v156, %v159
    %v164 = vmul.f32 %v155, %v160
    %v165 = vmul.f32 %v154, %v161
    %v166 = vmul.f32 %v157, %v162
    %167 = vst [vmem:[#allocation2 + $0xa0] sm:$0xff] %v163
    %168 = vst [vmem:[#allocation2 + $0xa8] sm:$0xff] %v164
    %169 = vst [vmem:[#allocation2 + $0xb0] sm:$0xff] %v165
    %170 = vst [vmem:[#allocation2 + $0xb8] sm:$0xff] %v166
    %171 = vrot.lane.b32.xlu0 %v32, 113
    %v172 = vpop.permute.xlu0 %171
    %173 = vrot.lane.b32.xlu0 %v33, 113
    %v174 = vpop.permute.xlu0 %173
    %175 = vrot.lane.b32.xlu0 %v34, 113
    %v176 = vpop.permute.xlu0 %175
    %177 = vrot.lane.b32.xlu0 %v35, 113
    %v178 = vpop.permute.xlu0 %177
    %vm179 = vcmp.lt.s32.totalorder %v45, 113
    %v180 = vsel %vm179, %v176, %v178
    %v181 = vsel %vm179, %v174, %v176
    %v182 = vsel %vm179, %v172, %v174
    %v183 = vsel %vm179, %v178, %v172
    %s184 = scalar_lea.vmem [#allocation3], 192
    %v185 = vld [vmem:[%s184] sm:$0xff]
    %v186 = vld [vmem:[%s184 + $0x8] sm:$0xff]
    %v187 = vld [vmem:[%s184 + $0x10] sm:$0xff]
    %v188 = vld [vmem:[%s184 + $0x18] sm:$0xff]
    %v189 = vmul.f32 %v182, %v185
    %v190 = vmul.f32 %v181, %v186
    %v191 = vmul.f32 %v180, %v187
    %v192 = vmul.f32 %v183, %v188
    %193 = vst [vmem:[#allocation2 + $0xc0] sm:$0xff] %v189
    %194 = vst [vmem:[#allocation2 + $0xc8] sm:$0xff] %v190
    %195 = vst [vmem:[#allocation2 + $0xd0] sm:$0xff] %v191
    %196 = vst [vmem:[#allocation2 + $0xd8] sm:$0xff] %v192
    %197 = vrot.lane.b32.xlu0 %v32, 112
    %v198 = vpop.permute.xlu0 %197
    %199 = vrot.lane.b32.xlu0 %v33, 112
    %v200 = vpop.permute.xlu0 %199
    %201 = vrot.lane.b32.xlu0 %v34, 112
    %v202 = vpop.permute.xlu0 %201
    %203 = vrot.lane.b32.xlu0 %v35, 112
    %v204 = vpop.permute.xlu0 %203
    %vm205 = vcmp.lt.s32.totalorder %v45, 112
    %v206 = vsel %vm205, %v202, %v204
    %v207 = vsel %vm205, %v200, %v202
    %v208 = vsel %vm205, %v198, %v200
    %v209 = vsel %vm205, %v204, %v198
    %s210 = scalar_lea.vmem [#allocation3], 224
    %v211 = vld [vmem:[%s210] sm:$0xff]
    %v212 = vld [vmem:[%s210 + $0x8] sm:$0xff]
    %v213 = vld [vmem:[%s210 + $0x10] sm:$0xff]
    %v214 = vld [vmem:[%s210 + $0x18] sm:$0xff]
    %v215 = vmul.f32 %v208, %v211
    %v216 = vmul.f32 %v207, %v212
    %v217 = vmul.f32 %v206, %v213
    %v218 = vmul.f32 %v209, %v214
    %219 = vst [vmem:[#allocation2 + $0xe0] sm:$0xff] %v215
    %220 = vst [vmem:[#allocation2 + $0xe8] sm:$0xff] %v216
    %221 = vst [vmem:[#allocation2 + $0xf0] sm:$0xff] %v217
    %222 = vst [vmem:[#allocation2 + $0xf8] sm:$0xff] %v218
    %223 = vrot.lane.b32.xlu0 %v32, 111
    %v224 = vpop.permute.xlu0 %223
    %225 = vrot.lane.b32.xlu0 %v33, 111
    %v226 = vpop.permute.xlu0 %225
    %227 = vrot.lane.b32.xlu0 %v34, 111
    %v228 = vpop.permute.xlu0 %227
    %229 = vrot.lane.b32.xlu0 %v35, 111
    %v230 = vpop.permute.xlu0 %229
    %vm231 = vcmp.lt.s32.totalorder %v45, 111
    %v232 = vsel %vm231, %v228, %v230
    %v233 = vsel %vm231, %v226, %v228
    %v234 = vsel %vm231, %v224, %v226
    %v235 = vsel %vm231, %v230, %v224
    %s236 = scalar_lea.vmem [#allocation3], 256
    %v237 = vld [vmem:[%s236] sm:$0xff]
    %v238 = vld [vmem:[%s236 + $0x8] sm:$0xff]
    %v239 = vld [vmem:[%s236 + $0x10] sm:$0xff]
    %v240 = vld [vmem:[%s236 + $0x18] sm:$0xff]
    %v241 = vmul.f32 %v234, %v237
    %v242 = vmul.f32 %v233, %v238
    %v243 = vmul.f32 %v232, %v239
    %v244 = vmul.f32 %v235, %v240
    %245 = vst [vmem:[#allocation2 + $0x100] sm:$0xff] %v241
    %246 = vst [vmem:[#allocation2 + $0x108] sm:$0xff] %v242
    %247 = vst [vmem:[#allocation2 + $0x110] sm:$0xff] %v243
    %248 = vst [vmem:[#allocation2 + $0x118] sm:$0xff] %v244
    %v249 = vld [vmem:[%s1] sm:$0xff]
    %v250 = vld [vmem:[%s1 + $0x8] sm:$0xff]
    %v251 = vld [vmem:[%s1 + $0x10] sm:$0xff]
    %v252 = vld [vmem:[%s1 + $0x18] sm:$0xff]
    %v253 = vld [vmem:[#allocation2] sm:$0xff]
    %v254 = vld [vmem:[#allocation2 + $0x8] sm:$0xff]
    %v255 = vld [vmem:[#allocation2 + $0x10] sm:$0xff]
    %v256 = vld [vmem:[#allocation2 + $0x18] sm:$0xff]
    %v257 = vld [vmem:[#allocation2 + $0x20] sm:$0xff]
    %v258 = vld [vmem:[#allocation2 + $0x28] sm:$0xff]
    %v259 = vld [vmem:[#allocation2 + $0x30] sm:$0xff]
    %v260 = vld [vmem:[#allocation2 + $0x38] sm:$0xff]
    %v261 = vld [vmem:[#allocation2 + $0x40] sm:$0xff]
    %v262 = vld [vmem:[#allocation2 + $0x48] sm:$0xff]
    %v263 = vld [vmem:[#allocation2 + $0x50] sm:$0xff]
    %v264 = vld [vmem:[#allocation2 + $0x58] sm:$0xff]
    %v265 = vld [vmem:[#allocation2 + $0x60] sm:$0xff]
    %v266 = vld [vmem:[#allocation2 + $0x68] sm:$0xff]
    %v267 = vld [vmem:[#allocation2 + $0x70] sm:$0xff]
    %v268 = vld [vmem:[#allocation2 + $0x78] sm:$0xff]
    %v269 = vld [vmem:[#allocation2 + $0x80] sm:$0xff]
    %v270 = vld [vmem:[#allocation2 + $0x88] sm:$0xff]
    %v271 = vld [vmem:[#allocation2 + $0x90] sm:$0xff]
    %v272 = vld [vmem:[#allocation2 + $0x98] sm:$0xff]
    %v273 = vld [vmem:[#allocation2 + $0xa0] sm:$0xff]
    %v274 = vld [vmem:[#allocation2 + $0xa8] sm:$0xff]
    %v275 = vld [vmem:[#allocation2 + $0xb0] sm:$0xff]
    %v276 = vld [vmem:[#allocation2 + $0xb8] sm:$0xff]
    %v277 = vld [vmem:[#allocation2 + $0xc0] sm:$0xff]
    %v278 = vld [vmem:[#allocation2 + $0xc8] sm:$0xff]
    %v279 = vld [vmem:[#allocation2 + $0xd0] sm:$0xff]
    %v280 = vld [vmem:[#allocation2 + $0xd8] sm:$0xff]
    %v281 = vld [vmem:[#allocation2 + $0xe0] sm:$0xff]
    %v282 = vld [vmem:[#allocation2 + $0xe8] sm:$0xff]
    %v283 = vld [vmem:[#allocation2 + $0xf0] sm:$0xff]
    %v284 = vld [vmem:[#allocation2 + $0xf8] sm:$0xff]
    %v285 = vld [vmem:[#allocation2 + $0x100] sm:$0xff]
    %v286 = vld [vmem:[#allocation2 + $0x108] sm:$0xff]
    %v287 = vld [vmem:[#allocation2 + $0x110] sm:$0xff]
    %v288 = vld [vmem:[#allocation2 + $0x118] sm:$0xff]
    %vm289 = vcmask 588800
    %v291 = vsel %vm289, %v249, 0
    %v294 = vsel %vm289, %v250, 0
    %v297 = vsel %vm289, %v251, 0
    %v300 = vsel %vm289, %v252, 0
    %302 = vmatprep.subr.mxu0 %v254
    %303 = vmatpush1.msra.mxu0 %v253
    %304 = vmatprep.subr.mxu0 %v258
    %305 = vmatpush1.msra.mxu0 %v257
    %306 = vmatprep.subr.mxu0 %v262
    %307 = vmatpush1.msra.mxu0 %v261
    %308 = vmatprep.subr.mxu0 %v266
    %309 = vmatpush1.msra.mxu0 %v265
    %310 = vmatprep.subr.mxu0 %v270
    %311 = vmatpush1.msra.mxu0 %v269
    %312 = vmatprep.subr.mxu0 %v274
    %313 = vmatpush1.msra.mxu0 %v273
    %314 = vmatprep.subr.mxu0 %v278
    %315 = vmatpush1.msra.mxu0 %v277
    %316 = vmatprep.subr.mxu0 %v282
    %317 = vmatpush1.msra.mxu0 %v281
    %318 = vmatprep.subr.mxu0 %v286
    %319 = vmatpush1.msra.mxu0 %v285
    %320 = vmatprep.subr.mxu0 0.0
    %321 = vmatpush1.msra.mxu0 0.0
    %322 = vmatprep.subr.mxu0 0.0
    %323 = vmatpush1.msra.mxu0 0.0
    %324 = vmatprep.subr.mxu0 0.0
    %325 = vmatpush1.msra.mxu0 0.0
    %326 = vmatprep.subr.mxu0 0.0
    %327 = vmatpush1.msra.mxu0 0.0
    %328 = vmatprep.subr.mxu0 0.0
    %329 = vmatpush1.msra.mxu0 0.0
    %330 = vmatprep.subr.mxu0 0.0
    %331 = vmatpush1.msra.mxu0 0.0
    %332 = vmatprep.subr.mxu0 0.0
    %333 = vmatpush1.msra.mxu0 0.0
    %334 = vmatprep.subr.mxu0 0.0
    %335 = vmatpush1.msra.mxu0 0.0
    %336 = vmatprep.subr.mxu0 0.0
    %337 = vmatpush1.msra.mxu0 0.0
    %338 = vmatprep.subr.mxu0 0.0
    %339 = vmatpush1.msra.mxu0 0.0
    %340 = vmatprep.subr.mxu0 0.0
    %341 = vmatpush1.msra.mxu0 0.0
    %342 = vmatprep.subr.mxu0 0.0
    %343 = vmatpush1.msra.mxu0 0.0
    %344 = vmatprep.subr.mxu0 0.0
    %345 = vmatpush1.msra.mxu0 0.0
    %346 = vmatprep.subr.mxu0 0.0
    %347 = vmatpush1.msra.mxu0 0.0
    %348 = vmatprep.subr.mxu0 0.0
    %349 = vmatpush1.msra.mxu0 0.0
    %350 = vmatprep.subr.mxu0 0.0
    %351 = vmatpush1.msra.mxu0 0.0
    %352 = vmatprep.subr.mxu0 0.0
    %353 = vmatpush1.msra.mxu0 0.0
    %354 = vmatprep.subr.mxu0 0.0
    %355 = vmatpush1.msra.mxu0 0.0
    %356 = vmatprep.subr.mxu0 0.0
    %357 = vmatpush1.msra.mxu0 0.0
    %358 = vmatprep.subr.mxu0 0.0
    %359 = vmatpush1.msra.mxu0 0.0
    %360 = vmatprep.subr.mxu0 0.0
    %361 = vmatpush1.msra.mxu0 0.0
    %362 = vmatprep.subr.mxu0 0.0
    %363 = vmatpush1.msra.mxu0 0.0
    %364 = vmatprep.subr.mxu0 0.0
    %365 = vmatpush1.msra.mxu0 0.0
    %366 = vmatprep.mubr.f32.mxu0 0.0
    %367 = vmatmul.mubr.f32.gmra.mrb[0].mxu0 %v291
    %v368 = vpop.f32.mrb[0].mxu0
    %v369 = vadd.f32 0.0, %v368
    %v370 = vpop.f32.mrb[0].mxu0
    %v371 = vadd.f32 0.0, %v370
    %372 = vmatprep.mubr.f32.mxu0 0.0
    %373 = vmatmul.mubr.f32.gmra.mrb[0].mxu0 %v294
    %v374 = vpop.f32.mrb[0].mxu0
    %v375 = vadd.f32 0.0, %v374
    %v376 = vpop.f32.mrb[0].mxu0
    %v377 = vadd.f32 0.0, %v376
    %378 = vmatprep.mubr.f32.mxu0 0.0
    %379 = vmatmul.mubr.f32.gmra.mrb[0].mxu0 %v297
    %v380 = vpop.f32.mrb[0].mxu0
    %v381 = vadd.f32 0.0, %v380
    %v382 = vpop.f32.mrb[0].mxu0
    %v383 = vadd.f32 0.0, %v382
    %384 = vmatprep.mubr.f32.mxu0 0.0
    %385 = vmatmul.mubr.f32.gmra.mrb[0].mxu0 %v300
    %v386 = vpop.f32.mrb[0].mxu0
    %v387 = vadd.f32 0.0, %v386
    %v388 = vpop.f32.mrb[0].mxu0
    %v389 = vadd.f32 0.0, %v388
    %390 = vdwg.mxu0
    %391 = vmatprep.subr.mxu0 %v256
    %392 = vmatpush1.msra.mxu0 %v255
    %393 = vmatprep.subr.mxu0 %v260
    %394 = vmatpush1.msra.mxu0 %v259
    %395 = vmatprep.subr.mxu0 %v264
    %396 = vmatpush1.msra.mxu0 %v263
    %397 = vmatprep.subr.mxu0 %v268
    %398 = vmatpush1.msra.mxu0 %v267
    %399 = vmatprep.subr.mxu0 %v272
    %400 = vmatpush1.msra.mxu0 %v271
    %401 = vmatprep.subr.mxu0 %v276
    %402 = vmatpush1.msra.mxu0 %v275
    %403 = vmatprep.subr.mxu0 %v280
    %404 = vmatpush1.msra.mxu0 %v279
    %405 = vmatprep.subr.mxu0 %v284
    %406 = vmatpush1.msra.mxu0 %v283
    %407 = vmatprep.subr.mxu0 %v288
    %408 = vmatpush1.msra.mxu0 %v287
    %409 = vmatprep.subr.mxu0 0.0
    %410 = vmatpush1.msra.mxu0 0.0
    %411 = vmatprep.subr.mxu0 0.0
    %412 = vmatpush1.msra.mxu0 0.0
    %413 = vmatprep.subr.mxu0 0.0
    %414 = vmatpush1.msra.mxu0 0.0
    %415 = vmatprep.subr.mxu0 0.0
    %416 = vmatpush1.msra.mxu0 0.0
    %417 = vmatprep.subr.mxu0 0.0
    %418 = vmatpush1.msra.mxu0 0.0
    %419 = vmatprep.subr.mxu0 0.0
    %420 = vmatpush1.msra.mxu0 0.0
    %421 = vmatprep.subr.mxu0 0.0
    %422 = vmatpush1.msra.mxu0 0.0
    %423 = vmatprep.subr.mxu0 0.0
    %424 = vmatpush1.msra.mxu0 0.0
    %425 = vmatprep.subr.mxu0 0.0
    %426 = vmatpush1.msra.mxu0 0.0
    %427 = vmatprep.subr.mxu0 0.0
    %428 = vmatpush1.msra.mxu0 0.0
    %429 = vmatprep.subr.mxu0 0.0
    %430 = vmatpush1.msra.mxu0 0.0
    %431 = vmatprep.subr.mxu0 0.0
    %432 = vmatpush1.msra.mxu0 0.0
    %433 = vmatprep.subr.mxu0 0.0
    %434 = vmatpush1.msra.mxu0 0.0
    %435 = vmatprep.subr.mxu0 0.0
    %436 = vmatpush1.msra.mxu0 0.0
    %437 = vmatprep.subr.mxu0 0.0
    %438 = vmatpush1.msra.mxu0 0.0
    %439 = vmatprep.subr.mxu0 0.0
    %440 = vmatpush1.msra.mxu0 0.0
    %441 = vmatprep.subr.mxu0 0.0
    %442 = vmatpush1.msra.mxu0 0.0
    %443 = vmatprep.subr.mxu0 0.0
    %444 = vmatpush1.msra.mxu0 0.0
    %445 = vmatprep.subr.mxu0 0.0
    %446 = vmatpush1.msra.mxu0 0.0
    %447 = vmatprep.subr.mxu0 0.0
    %448 = vmatpush1.msra.mxu0 0.0
    %449 = vmatprep.subr.mxu0 0.0
    %450 = vmatpush1.msra.mxu0 0.0
    %451 = vmatprep.subr.mxu0 0.0
    %452 = vmatpush1.msra.mxu0 0.0
    %453 = vmatprep.subr.mxu0 0.0
    %454 = vmatpush1.msra.mxu0 0.0
    %455 = vmatprep.mubr.f32.mxu0 0.0
    %456 = vmatmul.mubr.f32.gmra.mrb[0].mxu0 %v291
    %v457 = vpop.f32.mrb[0].mxu0
    %v458 = vadd.f32 0.0, %v457
    %v459 = vpop.f32.mrb[0].mxu0
    %v460 = vadd.f32 0.0, %v459
    %461 = vmatprep.mubr.f32.mxu0 0.0
    %462 = vmatmul.mubr.f32.gmra.mrb[0].mxu0 %v294
    %v463 = vpop.f32.mrb[0].mxu0
    %v464 = vadd.f32 0.0, %v463
    %v465 = vpop.f32.mrb[0].mxu0
    %v466 = vadd.f32 0.0, %v465
    %467 = vmatprep.mubr.f32.mxu0 0.0
    %468 = vmatmul.mubr.f32.gmra.mrb[0].mxu0 %v297
    %v469 = vpop.f32.mrb[0].mxu0
    %v470 = vadd.f32 0.0, %v469
    %v471 = vpop.f32.mrb[0].mxu0
    %v472 = vadd.f32 0.0, %v471
    %473 = vmatprep.mubr.f32.mxu0 0.0
    %474 = vmatmul.mubr.f32.gmra.mrb[0].mxu0 %v300
    %v475 = vpop.f32.mrb[0].mxu0
    %v476 = vadd.f32 0.0, %v475
    %v477 = vpop.f32.mrb[0].mxu0
    %v478 = vadd.f32 0.0, %v477
    %479 = vdwg.mxu0
    %v480 = vmax.f32 %v369, 0.0
    %v481 = vmax.f32 %v371, 0.0
    %v482 = vmax.f32 %v458, 0.0
    %v483 = vmax.f32 %v460, 0.0
    %v484 = vmax.f32 %v375, 0.0
    %v485 = vmax.f32 %v377, 0.0
    %v486 = vmax.f32 %v464, 0.0
    %v487 = vmax.f32 %v466, 0.0
    %v488 = vmax.f32 %v381, 0.0
    %v489 = vmax.f32 %v383, 0.0
    %v490 = vmax.f32 %v470, 0.0
    %v491 = vmax.f32 %v472, 0.0
    %v492 = vmax.f32 %v387, 0.0
    %v493 = vmax.f32 %v389, 0.0
    %v494 = vmax.f32 %v476, 0.0
    %v495 = vmax.f32 %v478, 0.0
    %v496 = vld [vmem:[%s2] sm:$0xff]
    %v497 = vld [vmem:[%s2 + $0x8] sm:$0xff]
    %v498 = vld [vmem:[%s2 + $0x10] sm:$0xff]
    %v499 = vld [vmem:[%s2 + $0x18] sm:$0xff]
    %v500 = vld [vmem:[%s2 + $0x20] sm:$0xff]
    %v501 = vld [vmem:[%s2 + $0x28] sm:$0xff]
    %v502 = vld [vmem:[%s2 + $0x30] sm:$0xff]
    %v503 = vld [vmem:[%s2 + $0x38] sm:$0xff]
    %v504 = vld [vmem:[%s2 + $0x40] sm:$0xff]
    %vm505 = vcmask 261120
    %v507 = vsel %vm505, %v496, 0
    %v510 = vsel %vm505, %v497, 0
    %v513 = vsel %vm505, %v498, 0
    %v516 = vsel %vm505, %v499, 0
    %v519 = vsel %vm505, %v500, 0
    %v522 = vsel %vm505, %v501, 0
    %v525 = vsel %vm505, %v502, 0
    %v528 = vsel %vm505, %v503, 0
    %v531 = vsel %vm505, %v504, 0
    %533 = vmatprep.subr.mxu0 %v481
    %534 = vmatpush1.msra.mxu0 %v480
    %535 = vmatprep.subr.mxu0 %v485
    %536 = vmatpush1.msra.mxu0 %v484
    %537 = vmatprep.subr.mxu0 %v489
    %538 = vmatpush1.msra.mxu0 %v488
    %539 = vmatprep.subr.mxu0 %v493
    %540 = vmatpush1.msra.mxu0 %v492
    %541 = vmatprep.subr.mxu0 0.0
    %542 = vmatpush1.msra.mxu0 0.0
    %543 = vmatprep.subr.mxu0 0.0
    %544 = vmatpush1.msra.mxu0 0.0
    %545 = vmatprep.subr.mxu0 0.0
    %546 = vmatpush1.msra.mxu0 0.0
    %547 = vmatprep.subr.mxu0 0.0
    %548 = vmatpush1.msra.mxu0 0.0
    %549 = vmatprep.subr.mxu0 0.0
    %550 = vmatpush1.msra.mxu0 0.0
    %551 = vmatprep.subr.mxu0 0.0
    %552 = vmatpush1.msra.mxu0 0.0
    %553 = vmatprep.subr.mxu0 0.0
    %554 = vmatpush1.msra.mxu0 0.0
    %555 = vmatprep.subr.mxu0 0.0
    %556 = vmatpush1.msra.mxu0 0.0
    %557 = vmatprep.subr.mxu0 0.0
    %558 = vmatpush1.msra.mxu0 0.0
    %559 = vmatprep.subr.mxu0 0.0
    %560 = vmatpush1.msra.mxu0 0.0
    %561 = vmatprep.subr.mxu0 0.0
    %562 = vmatpush1.msra.mxu0 0.0
    %563 = vmatprep.subr.mxu0 0.0
    %564 = vmatpush1.msra.mxu0 0.0
    %565 = vmatprep.subr.mxu0 0.0
    %566 = vmatpush1.msra.mxu0 0.0
    %567 = vmatprep.subr.mxu0 0.0
    %568 = vmatpush1.msra.mxu0 0.0
    %569 = vmatprep.subr.mxu0 0.0
    %570 = vmatpush1.msra.mxu0 0.0
    %571 = vmatprep.subr.mxu0 0.0
    %572 = vmatpush1.msra.mxu0 0.0
    %573 = vmatprep.subr.mxu0 0.0
    %574 = vmatpush1.msra.mxu0 0.0
    %575 = vmatprep.subr.mxu0 0.0
    %576 = vmatpush1.msra.mxu0 0.0
    %577 = vmatprep.subr.mxu0 0.0
    %578 = vmatpush1.msra.mxu0 0.0
    %579 = vmatprep.subr.mxu0 0.0
    %580 = vmatpush1.msra.mxu0 0.0
    %581 = vmatprep.subr.mxu0 0.0
    %582 = vmatpush1.msra.mxu0 0.0
    %583 = vmatprep.subr.mxu0 0.0
    %584 = vmatpush1.msra.mxu0 0.0
    %585 = vmatprep.subr.mxu0 0.0
    %586 = vmatpush1.msra.mxu0 0.0
    %587 = vmatprep.subr.mxu0 0.0
    %588 = vmatpush1.msra.mxu0 0.0
    %589 = vmatprep.subr.mxu0 0.0
    %590 = vmatpush1.msra.mxu0 0.0
    %591 = vmatprep.subr.mxu0 0.0
    %592 = vmatpush1.msra.mxu0 0.0
    %593 = vmatprep.subr.mxu0 0.0
    %594 = vmatpush1.msra.mxu0 0.0
    %595 = vmatprep.subr.mxu0 0.0
    %596 = vmatpush1.msra.mxu0 0.0
    %597 = vmatprep.mubr.f32.mxu0 0.0
    %598 = vmatmul.mubr.f32.gmra.mrb[0].mxu0 %v507
    %v599 = vpop.f32.mrb[0].mxu0
    %v600 = vadd.f32 0.0, %v599
    %v601 = vpop.f32.mrb[0].mxu0
    %v602 = vadd.f32 0.0, %v601
    %603 = vmatprep.mubr.f32.mxu0 0.0
    %604 = vmatmul.mubr.f32.gmra.mrb[0].mxu0 %v510
    %v605 = vpop.f32.mrb[0].mxu0
    %v606 = vadd.f32 0.0, %v605
    %v607 = vpop.f32.mrb[0].mxu0
    %v608 = vadd.f32 0.0, %v607
    %609 = vmatprep.mubr.f32.mxu0 0.0
    %610 = vmatmul.mubr.f32.gmra.mrb[0].mxu0 %v513
    %v611 = vpop.f32.mrb[0].mxu0
    %v612 = vadd.f32 0.0, %v611
    %v613 = vpop.f32.mrb[0].mxu0
    %v614 = vadd.f32 0.0, %v613
    %615 = vmatprep.mubr.f32.mxu0 0.0
    %616 = vmatmul.mubr.f32.gmra.mrb[0].mxu0 %v516
    %v617 = vpop.f32.mrb[0].mxu0
    %v618 = vadd.f32 0.0, %v617
    %v619 = vpop.f32.mrb[0].mxu0
    %v620 = vadd.f32 0.0, %v619
    %621 = vmatprep.mubr.f32.mxu0 0.0
    %622 = vmatmul.mubr.f32.gmra.mrb[0].mxu0 %v519
    %v623 = vpop.f32.mrb[0].mxu0
    %v624 = vadd.f32 0.0, %v623
    %v625 = vpop.f32.mrb[0].mxu0
    %v626 = vadd.f32 0.0, %v625
    %627 = vmatprep.mubr.f32.mxu0 0.0
    %628 = vmatmul.mubr.f32.gmra.mrb[0].mxu0 %v522
    %v629 = vpop.f32.mrb[0].mxu0
    %v630 = vadd.f32 0.0, %v629
    %v631 = vpop.f32.mrb[0].mxu0
    %v632 = vadd.f32 0.0, %v631
    %633 = vmatprep.mubr.f32.mxu0 0.0
    %634 = vmatmul.mubr.f32.gmra.mrb[0].mxu0 %v525
    %v635 = vpop.f32.mrb[0].mxu0
    %v636 = vadd.f32 0.0, %v635
    %v637 = vpop.f32.mrb[0].mxu0
    %v638 = vadd.f32 0.0, %v637
    %639 = vmatprep.mubr.f32.mxu0 0.0
    %640 = vmatmul.mubr.f32.gmra.mrb[0].mxu0 %v528
    %v641 = vpop.f32.mrb[0].mxu0
    %v642 = vadd.f32 0.0, %v641
    %v643 = vpop.f32.mrb[0].mxu0
    %v644 = vadd.f32 0.0, %v643
    %645 = vmatprep.mubr.f32.mxu0 0.0
    %646 = vmatmul.mubr.f32.gmra.mrb[0].mxu0 %v531
    %v647 = vpop.f32.mrb[0].mxu0
    %v648 = vadd.f32 0.0, %v647
    %v649 = vpop.f32.mrb[0].mxu0
    %v650 = vadd.f32 0.0, %v649
    %651 = vdwg.mxu0
    %652 = vmatprep.subr.mxu0 %v483
    %653 = vmatpush1.msra.mxu0 %v482
    %654 = vmatprep.subr.mxu0 %v487
    %655 = vmatpush1.msra.mxu0 %v486
    %656 = vmatprep.subr.mxu0 %v491
    %657 = vmatpush1.msra.mxu0 %v490
    %658 = vmatprep.subr.mxu0 %v495
    %659 = vmatpush1.msra.mxu0 %v494
    %660 = vmatprep.subr.mxu0 0.0
    %661 = vmatpush1.msra.mxu0 0.0
    %662 = vmatprep.subr.mxu0 0.0
    %663 = vmatpush1.msra.mxu0 0.0
    %664 = vmatprep.subr.mxu0 0.0
    %665 = vmatpush1.msra.mxu0 0.0
    %666 = vmatprep.subr.mxu0 0.0
    %667 = vmatpush1.msra.mxu0 0.0
    %668 = vmatprep.subr.mxu0 0.0
    %669 = vmatpush1.msra.mxu0 0.0
    %670 = vmatprep.subr.mxu0 0.0
    %671 = vmatpush1.msra.mxu0 0.0
    %672 = vmatprep.subr.mxu0 0.0
    %673 = vmatpush1.msra.mxu0 0.0
    %674 = vmatprep.subr.mxu0 0.0
    %675 = vmatpush1.msra.mxu0 0.0
    %676 = vmatprep.subr.mxu0 0.0
    %677 = vmatpush1.msra.mxu0 0.0
    %678 = vmatprep.subr.mxu0 0.0
    %679 = vmatpush1.msra.mxu0 0.0
    %680 = vmatprep.subr.mxu0 0.0
    %681 = vmatpush1.msra.mxu0 0.0
    %682 = vmatprep.subr.mxu0 0.0
    %683 = vmatpush1.msra.mxu0 0.0
    %684 = vmatprep.subr.mxu0 0.0
    %685 = vmatpush1.msra.mxu0 0.0
    %686 = vmatprep.subr.mxu0 0.0
    %687 = vmatpush1.msra.mxu0 0.0
    %688 = vmatprep.subr.mxu0 0.0
    %689 = vmatpush1.msra.mxu0 0.0
    %690 = vmatprep.subr.mxu0 0.0
    %691 = vmatpush1.msra.mxu0 0.0
    %692 = vmatprep.subr.mxu0 0.0
    %693 = vmatpush1.msra.mxu0 0.0
    %694 = vmatprep.subr.mxu0 0.0
    %695 = vmatpush1.msra.mxu0 0.0
    %696 = vmatprep.subr.mxu0 0.0
    %697 = vmatpush1.msra.mxu0 0.0
    %698 = vmatprep.subr.mxu0 0.0
    %699 = vmatpush1.msra.mxu0 0.0
    %700 = vmatprep.subr.mxu0 0.0
    %701 = vmatpush1.msra.mxu0 0.0
    %702 = vmatprep.subr.mxu0 0.0
    %703 = vmatpush1.msra.mxu0 0.0
    %704 = vmatprep.subr.mxu0 0.0
    %705 = vmatpush1.msra.mxu0 0.0
    %706 = vmatprep.subr.mxu0 0.0
    %707 = vmatpush1.msra.mxu0 0.0
    %708 = vmatprep.subr.mxu0 0.0
    %709 = vmatpush1.msra.mxu0 0.0
    %710 = vmatprep.subr.mxu0 0.0
    %711 = vmatpush1.msra.mxu0 0.0
    %712 = vmatprep.subr.mxu0 0.0
    %713 = vmatpush1.msra.mxu0 0.0
    %714 = vmatprep.subr.mxu0 0.0
    %715 = vmatpush1.msra.mxu0 0.0
    %716 = vmatprep.mubr.f32.mxu0 0.0
    %717 = vmatmul.mubr.f32.gmra.mrb[0].mxu0 %v507
    %v718 = vpop.f32.mrb[0].mxu0
    %v719 = vadd.f32 0.0, %v718
    %v720 = vpop.f32.mrb[0].mxu0
    %v721 = vadd.f32 0.0, %v720
    %722 = vmatprep.mubr.f32.mxu0 0.0
    %723 = vmatmul.mubr.f32.gmra.mrb[0].mxu0 %v510
    %v724 = vpop.f32.mrb[0].mxu0
    %v725 = vadd.f32 0.0, %v724
    %v726 = vpop.f32.mrb[0].mxu0
    %v727 = vadd.f32 0.0, %v726
    %728 = vmatprep.mubr.f32.mxu0 0.0
    %729 = vmatmul.mubr.f32.gmra.mrb[0].mxu0 %v513
    %v730 = vpop.f32.mrb[0].mxu0
    %v731 = vadd.f32 0.0, %v730
    %v732 = vpop.f32.mrb[0].mxu0
    %v733 = vadd.f32 0.0, %v732
    %734 = vmatprep.mubr.f32.mxu0 0.0
    %735 = vmatmul.mubr.f32.gmra.mrb[0].mxu0 %v516
    %v736 = vpop.f32.mrb[0].mxu0
    %v737 = vadd.f32 0.0, %v736
    %v738 = vpop.f32.mrb[0].mxu0
    %v739 = vadd.f32 0.0, %v738
    %740 = vmatprep.mubr.f32.mxu0 0.0
    %741 = vmatmul.mubr.f32.gmra.mrb[0].mxu0 %v519
    %v742 = vpop.f32.mrb[0].mxu0
    %v743 = vadd.f32 0.0, %v742
    %v744 = vpop.f32.mrb[0].mxu0
    %v745 = vadd.f32 0.0, %v744
    %746 = vmatprep.mubr.f32.mxu0 0.0
    %747 = vmatmul.mubr.f32.gmra.mrb[0].mxu0 %v522
    %v748 = vpop.f32.mrb[0].mxu0
    %v749 = vadd.f32 0.0, %v748
    %v750 = vpop.f32.mrb[0].mxu0
    %v751 = vadd.f32 0.0, %v750
    %752 = vmatprep.mubr.f32.mxu0 0.0
    %753 = vmatmul.mubr.f32.gmra.mrb[0].mxu0 %v525
    %v754 = vpop.f32.mrb[0].mxu0
    %v755 = vadd.f32 0.0, %v754
    %v756 = vpop.f32.mrb[0].mxu0
    %v757 = vadd.f32 0.0, %v756
    %758 = vmatprep.mubr.f32.mxu0 0.0
    %759 = vmatmul.mubr.f32.gmra.mrb[0].mxu0 %v528
    %v760 = vpop.f32.mrb[0].mxu0
    %v761 = vadd.f32 0.0, %v760
    %v762 = vpop.f32.mrb[0].mxu0
    %v763 = vadd.f32 0.0, %v762
    %764 = vmatprep.mubr.f32.mxu0 0.0
    %765 = vmatmul.mubr.f32.gmra.mrb[0].mxu0 %v531
    %v766 = vpop.f32.mrb[0].mxu0
    %v767 = vadd.f32 0.0, %v766
    %v768 = vpop.f32.mrb[0].mxu0
    %v769 = vadd.f32 0.0, %v768
    %770 = vdwg.mxu0
    %771 = vrot.lane.b32.xlu0 %v600, 17
    %v772 = vpop.permute.xlu0 %771
    %773 = vrot.lane.b32.xlu0 %v602, 17
    %v774 = vpop.permute.xlu0 %773
    %775 = vrot.lane.b32.xlu0 %v719, 17
    %v776 = vpop.permute.xlu0 %775
    %777 = vrot.lane.b32.xlu0 %v721, 17
    %v778 = vpop.permute.xlu0 %777
    %v779 = vsel %vm46, %v776, %v778
    %v780 = vsel %vm46, %v774, %v776
    %v781 = vsel %vm46, %v772, %v774
    %v782 = vsel %vm46, %v778, %v772
    %v783 = vld [vmem:[#allocation3] sm:$0xff]
    %v784 = vld [vmem:[#allocation3 + $0x8] sm:$0xff]
    %v785 = vld [vmem:[#allocation3 + $0x10] sm:$0xff]
    %v786 = vld [vmem:[#allocation3 + $0x18] sm:$0xff]
    %v787 = vmul.f32 %v782, %v783
    %v788 = vmul.f32 %v781, %v784
    %v789 = vmul.f32 %v780, %v785
    %v790 = vmul.f32 %v779, %v786
    %v791 = vadd.f32 %v787, 0.0
    %v792 = vadd.f32 %v788, 0.0
    %v793 = vadd.f32 %v789, 0.0
    %v794 = vadd.f32 %v790, 0.0
    %795 = vrot.lane.b32.xlu0 %v606, 16
    %v796 = vpop.permute.xlu0 %795
    %797 = vrot.lane.b32.xlu0 %v608, 16
    %v798 = vpop.permute.xlu0 %797
    %799 = vrot.lane.b32.xlu0 %v725, 16
    %v800 = vpop.permute.xlu0 %799
    %801 = vrot.lane.b32.xlu0 %v727, 16
    %v802 = vpop.permute.xlu0 %801
    %v803 = vsel %vm71, %v800, %v802
    %v804 = vsel %vm71, %v798, %v800
    %v805 = vsel %vm71, %v796, %v798
    %v806 = vsel %vm71, %v802, %v796
    %v807 = vld [vmem:[%s76] sm:$0xff]
    %v808 = vld [vmem:[%s76 + $0x8] sm:$0xff]
    %v809 = vld [vmem:[%s76 + $0x10] sm:$0xff]
    %v810 = vld [vmem:[%s76 + $0x18] sm:$0xff]
    %v811 = vmul.f32 %v806, %v807
    %v812 = vmul.f32 %v805, %v808
    %v813 = vmul.f32 %v804, %v809
    %v814 = vmul.f32 %v803, %v810
    %v815 = vadd.f32 %v791, %v811
    %v816 = vadd.f32 %v792, %v812
    %v817 = vadd.f32 %v793, %v813
    %v818 = vadd.f32 %v794, %v814
    %819 = vrot.lane.b32.xlu0 %v612, 15
    %v820 = vpop.permute.xlu0 %819
    %821 = vrot.lane.b32.xlu0 %v614, 15
    %v822 = vpop.permute.xlu0 %821
    %823 = vrot.lane.b32.xlu0 %v731, 15
    %v824 = vpop.permute.xlu0 %823
    %825 = vrot.lane.b32.xlu0 %v733, 15
    %v826 = vpop.permute.xlu0 %825
    %v827 = vsel %vm97, %v824, %v826
    %v828 = vsel %vm97, %v822, %v824
    %v829 = vsel %vm97, %v820, %v822
    %v830 = vsel %vm97, %v826, %v820
    %v831 = vld [vmem:[%s102] sm:$0xff]
    %v832 = vld [vmem:[%s102 + $0x8] sm:$0xff]
    %v833 = vld [vmem:[%s102 + $0x10] sm:$0xff]
    %v834 = vld [vmem:[%s102 + $0x18] sm:$0xff]
    %v835 = vmul.f32 %v830, %v831
    %v836 = vmul.f32 %v829, %v832
    %v837 = vmul.f32 %v828, %v833
    %v838 = vmul.f32 %v827, %v834
    %v839 = vadd.f32 %v815, %v835
    %v840 = vadd.f32 %v816, %v836
    %v841 = vadd.f32 %v817, %v837
    %v842 = vadd.f32 %v818, %v838
    %843 = vrot.lane.b32.xlu0 %v618, 1
    %v844 = vpop.permute.xlu0 %843
    %845 = vrot.lane.b32.xlu0 %v620, 1
    %v846 = vpop.permute.xlu0 %845
    %847 = vrot.lane.b32.xlu0 %v737, 1
    %v848 = vpop.permute.xlu0 %847
    %849 = vrot.lane.b32.xlu0 %v739, 1
    %v850 = vpop.permute.xlu0 %849
    %v851 = vsel %vm123, %v848, %v850
    %v852 = vsel %vm123, %v846, %v848
    %v853 = vsel %vm123, %v844, %v846
    %v854 = vsel %vm123, %v850, %v844
    %v855 = vld [vmem:[%s128] sm:$0xff]
    %v856 = vld [vmem:[%s128 + $0x8] sm:$0xff]
    %v857 = vld [vmem:[%s128 + $0x10] sm:$0xff]
    %v858 = vld [vmem:[%s128 + $0x18] sm:$0xff]
    %v859 = vmul.f32 %v854, %v855
    %v860 = vmul.f32 %v853, %v856
    %v861 = vmul.f32 %v852, %v857
    %v862 = vmul.f32 %v851, %v858
    %v863 = vadd.f32 %v839, %v859
    %v864 = vadd.f32 %v840, %v860
    %v865 = vadd.f32 %v841, %v861
    %v866 = vadd.f32 %v842, %v862
    %v867 = vadd.f32 %v863, %v624
    %v868 = vadd.f32 %v864, %v626
    %v869 = vadd.f32 %v865, %v743
    %v870 = vadd.f32 %v866, %v745
    %871 = vrot.lane.b32.xlu0 %v630, 127
    %v872 = vpop.permute.xlu0 %871
    %873 = vrot.lane.b32.xlu0 %v632, 127
    %v874 = vpop.permute.xlu0 %873
    %875 = vrot.lane.b32.xlu0 %v749, 127
    %v876 = vpop.permute.xlu0 %875
    %877 = vrot.lane.b32.xlu0 %v751, 127
    %v878 = vpop.permute.xlu0 %877
    %v879 = vsel %vm153, %v876, %v878
    %v880 = vsel %vm153, %v874, %v876
    %v881 = vsel %vm153, %v872, %v874
    %v882 = vsel %vm153, %v878, %v872
    %v883 = vld [vmem:[%s158] sm:$0xff]
    %v884 = vld [vmem:[%s158 + $0x8] sm:$0xff]
    %v885 = vld [vmem:[%s158 + $0x10] sm:$0xff]
    %v886 = vld [vmem:[%s158 + $0x18] sm:$0xff]
    %v887 = vmul.f32 %v881, %v883
    %v888 = vmul.f32 %v880, %v884
    %v889 = vmul.f32 %v879, %v885
    %v890 = vmul.f32 %v882, %v886
    %v891 = vadd.f32 %v867, %v887
    %v892 = vadd.f32 %v868, %v888
    %v893 = vadd.f32 %v869, %v889
    %v894 = vadd.f32 %v870, %v890
    %895 = vrot.lane.b32.xlu0 %v636, 113
    %v896 = vpop.permute.xlu0 %895
    %897 = vrot.lane.b32.xlu0 %v638, 113
    %v898 = vpop.permute.xlu0 %897
    %899 = vrot.lane.b32.xlu0 %v755, 113
    %v900 = vpop.permute.xlu0 %899
    %901 = vrot.lane.b32.xlu0 %v757, 113
    %v902 = vpop.permute.xlu0 %901
    %v903 = vsel %vm179, %v900, %v902
    %v904 = vsel %vm179, %v898, %v900
    %v905 = vsel %vm179, %v896, %v898
    %v906 = vsel %vm179, %v902, %v896
    %v907 = vld [vmem:[%s184] sm:$0xff]
    %v908 = vld [vmem:[%s184 + $0x8] sm:$0xff]
    %v909 = vld [vmem:[%s184 + $0x10] sm:$0xff]
    %v910 = vld [vmem:[%s184 + $0x18] sm:$0xff]
    %v911 = vmul.f32 %v905, %v907
    %v912 = vmul.f32 %v904, %v908
    %v913 = vmul.f32 %v903, %v909
    %v914 = vmul.f32 %v906, %v910
    %v915 = vadd.f32 %v891, %v911
    %v916 = vadd.f32 %v892, %v912
    %v917 = vadd.f32 %v893, %v913
    %v918 = vadd.f32 %v894, %v914
    %919 = vrot.lane.b32.xlu0 %v642, 112
    %v920 = vpop.permute.xlu0 %919
    %921 = vrot.lane.b32.xlu0 %v644, 112
    %v922 = vpop.permute.xlu0 %921
    %923 = vrot.lane.b32.xlu0 %v761, 112
    %v924 = vpop.permute.xlu0 %923
    %925 = vrot.lane.b32.xlu0 %v763, 112
    %v926 = vpop.permute.xlu0 %925
    %v927 = vsel %vm205, %v924, %v926
    %v928 = vsel %vm205, %v922, %v924
    %v929 = vsel %vm205, %v920, %v922
    %v930 = vsel %vm205, %v926, %v920
    %v931 = vld [vmem:[%s210] sm:$0xff]
    %v932 = vld [vmem:[%s210 + $0x8] sm:$0xff]
    %v933 = vld [vmem:[%s210 + $0x10] sm:$0xff]
    %v934 = vld [vmem:[%s210 + $0x18] sm:$0xff]
    %v935 = vmul.f32 %v929, %v931
    %v936 = vmul.f32 %v928, %v932
    %v937 = vmul.f32 %v927, %v933
    %v938 = vmul.f32 %v930, %v934
    %v939 = vadd.f32 %v915, %v935
    %v940 = vadd.f32 %v916, %v936
    %v941 = vadd.f32 %v917, %v937
    %v942 = vadd.f32 %v918, %v938
    %943 = vrot.lane.b32.xlu0 %v648, 111
    %v944 = vpop.permute.xlu0 %943
    %945 = vrot.lane.b32.xlu0 %v650, 111
    %v946 = vpop.permute.xlu0 %945
    %947 = vrot.lane.b32.xlu0 %v767, 111
    %v948 = vpop.permute.xlu0 %947
    %949 = vrot.lane.b32.xlu0 %v769, 111
    %v950 = vpop.permute.xlu0 %949
    %v951 = vsel %vm231, %v948, %v950
    %v952 = vsel %vm231, %v946, %v948
    %v953 = vsel %vm231, %v944, %v946
    %v954 = vsel %vm231, %v950, %v944
    %v955 = vld [vmem:[%s236] sm:$0xff]
    %v956 = vld [vmem:[%s236 + $0x8] sm:$0xff]
    %v957 = vld [vmem:[%s236 + $0x10] sm:$0xff]
    %v958 = vld [vmem:[%s236 + $0x18] sm:$0xff]
    %v959 = vmul.f32 %v953, %v955
    %v960 = vmul.f32 %v952, %v956
    %v961 = vmul.f32 %v951, %v957
    %v962 = vmul.f32 %v954, %v958
    %v963 = vadd.f32 %v939, %v959
    %v964 = vadd.f32 %v940, %v960
    %v965 = vadd.f32 %v941, %v961
    %v966 = vadd.f32 %v942, %v962
    %967 = vst [vmem:[#allocation6] sm:$0xff] %v963
    %968 = vst [vmem:[#allocation6 + $0x8] sm:$0xff] %v964
    %969 = vst [vmem:[#allocation6 + $0x10] sm:$0xff] %v965
    %970 = vst [vmem:[#allocation6 + $0x18] sm:$0xff] %v966
    // Predicated region
    $region22: #{tpu_custom_call.1} parent=1 // pred_check
      _
    $region23: #{tpu_custom_call.1} parent=1 // pred_check_branch
      %972 = sbr.rel (0) target = $region25
    $region24: #{tpu_custom_call.1} parent=1 // pred_region
      %s974 = ssub.s32 512, 512
      %975 = vsyncadd [#allocation5], %s974
      %s977 = sshll.u32 [#allocation6], 4
      %s978 = int_to_ptr.vmem [resolvable:$true] %s977
      %980 = dma.vmem_to_hbm [thread:$0]  %s978, 512, %s4, [#allocation5]
    $region25: #{tpu_custom_call.1} parent=1 // pred_fallthru
      _
    // Predicated region
    $region26: #{tpu_custom_call.1} parent=1 // pred_check
      _
    $region27: #{tpu_custom_call.1} parent=1 // pred_check_branch
      %982 = sbr.rel (0) target = $region29
    $region28: #{tpu_custom_call.1} parent=1 // pred_region
      %983 = dma.done [#allocation5], 512
    $region29: #{tpu_custom_call.1} parent=1 // pred_fallthru
      _
    %984 = vsyncpa [#allocation4], 1
    %985 = vsyncpa [#allocation5], 1

</llo_original>
